<compile_context>
chip_gen: v7x
topology: tpu7x:2x2x1
jax: 0.10.0
libtpu: 0.0.40
codegen_flags: <defaults>
</compile_context>

<pallas_src>
import functools

import jax
import jax.numpy as jnp
from jax.experimental import pallas as pl
from jax.experimental.pallas import tpu as pltpu


def _round_up(x, m):
    return ((x + m - 1) // m) * m


# --------------------------------------------------------------------------
# Kernel
# --------------------------------------------------------------------------
def _ffn_kernel(x_ref, w13_ref, w2_ref, o_ref, acc_ref):
    # x_ref:   (tm, dim_p)         activation tile
    # w13_ref: (1, dim_p, 2*th)    packed [w1 | w3] tile for hidden block h
    # w2_ref:  (1, th, dim_p)      down-projection tile for hidden block h
    # o_ref:   (tm, dim_p)
    # acc_ref: (tm, dim_p) f32     VMEM accumulator (lives across hidden axis)
    h = pl.program_id(1)

    @pl.when(h == 0)
    def _():
        acc_ref[...] = jnp.zeros_like(acc_ref)

    w13 = w13_ref[0]                      # (dim_p, 2*th)
    w2 = w2_ref[0]                        # (th, dim_p)
    th = w2.shape[0]

    x = x_ref[...]
    # One wide matmul computes both gate (w1) and up (w3) projections.
    h13 = jnp.dot(x, w13, preferred_element_type=jnp.float32)   # (tm, 2*th)
    h1 = h13[:, :th]
    h3 = h13[:, th:]
    # SiLU in f32: sigmoid goes to the EUP, muls to the VPU.
    gated = (h1 * jax.nn.sigmoid(h1)) * h3
    acc_ref[...] += jnp.dot(gated.astype(w2.dtype), w2,
                            preferred_element_type=jnp.float32)

    @pl.when(h == pl.num_programs(1) - 1)
    def _():
        o_ref[...] = acc_ref[...].astype(o_ref.dtype)


# --------------------------------------------------------------------------
# Tile selection + weight packing (one-time glue, not the hot path)
# --------------------------------------------------------------------------
def choose_hidden_tile(dim, hidden, *, tm=256, itemsize=4,
                       vmem_budget_bytes=36 * 1024 * 1024):
    """Pick the hidden tile `th` (multiple of 128) so the double-buffered
    working set fits under `vmem_budget_bytes`.  Use a smaller budget on v7x
    (64 MiB VMEM) than on v5e/v6e (128 MiB)."""
    dim_p = _round_up(dim, 128)
    # 2x x-tile + 2x out-tile (double-buffered) + f32 accumulator
    fixed = 4 * tm * dim_p * itemsize + tm * dim_p * 4
    # double-buffered weight tiles: (dim_p, 2*th) + (th, dim_p)
    per_th = 2 * (2 * dim_p + dim_p) * itemsize
    th = (vmem_budget_bytes - fixed) // per_th
    th = max(128, (th // 128) * 128)
    th = min(th, _round_up(hidden, 128))
    return int(th)


def pack_ffn_weights(w1, w2, w3, *, th):
    """Repack PyTorch-layout weights (w1, w3: (hidden, dim); w2: (dim, hidden))
    into kernel layout.  Do this ONCE and reuse across calls.

    Returns:
      w13: (nh, dim_p, 2*th)  — per-hidden-tile [w1 | w3] slabs (contiguous DMA)
      w2p: (nh, th, dim_p)    — per-hidden-tile down-projection slabs
    """
    hidden, dim = w1.shape
    dim_p = _round_up(dim, 128)
    hidden_p = _round_up(hidden, th)
    nh = hidden_p // th

    # (in, out) layouts, zero-padded (padding is mathematically inert).
    w1t = jnp.zeros((dim_p, hidden_p), w1.dtype).at[:dim, :hidden].set(w1.T)
    w3t = jnp.zeros((dim_p, hidden_p), w3.dtype).at[:dim, :hidden].set(w3.T)
    w2t = jnp.zeros((hidden_p, dim_p), w2.dtype).at[:hidden, :dim].set(w2.T)

    w1r = w1t.reshape(dim_p, nh, th).transpose(1, 0, 2)   # (nh, dim_p, th)
    w3r = w3t.reshape(dim_p, nh, th).transpose(1, 0, 2)   # (nh, dim_p, th)
    w13 = jnp.concatenate([w1r, w3r], axis=-1)            # (nh, dim_p, 2*th)
    w2p = w2t.reshape(nh, th, dim_p)                      # (nh, th, dim_p)
    return w13, w2p


# --------------------------------------------------------------------------
# pallas_call wrappers
# --------------------------------------------------------------------------
def feed_forward_packed(x, w13, w2p, *, dim, tm=256,
                        vmem_limit_bytes=48 * 1024 * 1024):
    """Run the FFN kernel on pre-packed weights.  x: (..., dim)."""
    nh, dim_p, two_th = w13.shape
    th = two_th // 2

    lead = x.shape[:-1]
    xf = x.reshape(-1, dim)
    M = xf.shape[0]

    # Token tile: large enough to pipeline, never bigger than the problem.
    tm = min(tm, _round_up(M, 16))
    M_p = _round_up(M, tm)

    # Zero-pad tokens and feature dim (lane-dense >=128 last dim).
    xp = jnp.zeros((M_p, dim_p), x.dtype).at[:M, :dim].set(xf)

    grid = (M_p // tm, nh)

    # NOTE: weight tiles are double-buffered by default; the th budget in
    # choose_hidden_tile accounts for that.  (Single-buffering them via
    # pl.Buffered(1) would free VMEM for a larger th if needed.)
    out = pl.pallas_call(
        _ffn_kernel,
        out_shape=jax.ShapeDtypeStruct((M_p, dim_p), x.dtype),
        grid_spec=pltpu.PrefetchScalarGridSpec(
            num_scalar_prefetch=0,
            grid=grid,
            in_specs=[
                pl.BlockSpec((tm, dim_p), lambda i, h: (i, 0)),
                pl.BlockSpec((1, dim_p, 2 * th), lambda i, h: (h, 0, 0)),
                pl.BlockSpec((1, th, dim_p), lambda i, h: (h, 0, 0)),
            ],
            out_specs=pl.BlockSpec((tm, dim_p), lambda i, h: (i, 0)),
            scratch_shapes=[pltpu.VMEM((tm, dim_p), jnp.float32)],
        ),
        compiler_params=pltpu.CompilerParams(
            dimension_semantics=("parallel", "arbitrary"),
            vmem_limit_bytes=vmem_limit_bytes,
        ),
    )(xp, w13, w2p)

    return out[:M, :dim].reshape(*lead, dim)


def feed_forward(x, w1, w2, w3, *, tm=256, th=None,
                 vmem_budget_bytes=36 * 1024 * 1024,
                 vmem_limit_bytes=48 * 1024 * 1024):
    """Convenience wrapper: packs weights then calls the kernel.
    For production, call pack_ffn_weights() once (weights are static) and use
    feed_forward_packed directly; under jit the packing here is hoisted out of
    the Pallas kernel by XLA anyway.  Use bf16 x/weights in production (f32
    accumulation is preserved via preferred_element_type)."""
    dim = x.shape[-1]
    hidden = w1.shape[0]
    itemsize = jnp.dtype(x.dtype).itemsize
    if th is None:
        th = choose_hidden_tile(dim, hidden, tm=tm, itemsize=itemsize,
                                vmem_budget_bytes=vmem_budget_bytes)
    w13, w2p = pack_ffn_weights(w1, w2, w3, th=th)
    return feed_forward_packed(x, w13, w2p, dim=dim, tm=tm,
                               vmem_limit_bytes=vmem_limit_bytes)


def _round_hidden(hidden_dim, multiple_of):
    hidden_dim = int(7 * hidden_dim / 8)
    return multiple_of * ((hidden_dim + multiple_of - 1) // multiple_of)


# --------------------------------------------------------------------------
# Demo / correctness check (small shapes consistent with FeedForward)
# --------------------------------------------------------------------------
if __name__ == "__main__":
    dim = 64
    hidden_dim_in = 128
    multiple_of = 32
    hidden = _round_hidden(hidden_dim_in, multiple_of)   # int(7*128/8)=112 -> 128

    batch, seq = 2, 8

    key = jax.random.PRNGKey(0)
    kx, k1, k2, k3 = jax.random.split(key, 4)

    x = jax.random.normal(kx, (batch, seq, dim), dtype=jnp.float32)
    # Deterministic synthetic weights (PyTorch Linear layout: (out, in)).
    scale1 = 1.0 / (dim ** 0.5)
    scale2 = 1.0 / (hidden ** 0.5)
    w1 = jax.random.uniform(k1, (hidden, dim), jnp.float32, -scale1, scale1)
    w2 = jax.random.uniform(k2, (dim, hidden), jnp.float32, -scale2, scale2)
    w3 = jax.random.uniform(k3, (hidden, dim), jnp.float32, -scale1, scale1)

    ffn = jax.jit(feed_forward)
    out = jax.block_until_ready(ffn(x, w1, w2, w3))

    # Pure-JAX reference.
    h = x @ w1.T
    ref = (h * jax.nn.sigmoid(h) * (x @ w3.T)) @ w2.T
    assert out.shape == (batch, seq, dim)
    assert jnp.allclose(out, ref, atol=1e-4, rtol=1e-4)

    print("KERNEL_OK")
</pallas_src>

<mosaic_0001>
module attributes {stable_mosaic.version = 11 : i64} {
  func.func @_ffn_kernel(%arg0: i32, %arg1: i32, %arg2: memref<16x128xf32, #tpu.memory_space<vmem>>, %arg3: memref<1x128x256xf32, #tpu.memory_space<vmem>>, %arg4: memref<1x128x128xf32, #tpu.memory_space<vmem>>, %arg5: memref<16x128xf32, #tpu.memory_space<vmem>>, %arg6: memref<16x128xf32, #tpu.memory_space<vmem>>) attributes {dimension_semantics = [#tpu.dimension_semantics<parallel>, #tpu.dimension_semantics<arbitrary>], iteration_bounds = array<i64: 1, 1>, scalar_prefetch = 0 : i64, scratch_operands = 1 : i64, tpu.core_type = #tpu.core_type<tc>, window_params = [{transform_indices = @transform_0, window_bounds = array<i64: 16, 128>}, {transform_indices = @transform_1, window_bounds = array<i64: 1, 128, 256>}, {transform_indices = @transform_2, window_bounds = array<i64: 1, 128, 128>}, {transform_indices = @transform_3, window_bounds = array<i64: 16, 128>}]} {
    %c0_i32 = arith.constant 0 : i32
    %0 = arith.cmpi eq, %arg1, %c0_i32 : i32
    %1 = arith.extui %0 : i1 to i32
    %c0_i32_0 = arith.constant 0 : i32
    %2 = arith.cmpi ne, %1, %c0_i32_0 : i32
    scf.if %2 {
      %cst_16 = arith.constant 0.000000e+00 : f32
      %25 = vector.broadcast %cst_16 : f32 to vector<16x128xf32>
      %c0_17 = arith.constant 0 : index
      %c0_18 = arith.constant 0 : index
      %26 = vector.load %arg6[%c0_17, %c0_18] : memref<16x128xf32, #tpu.memory_space<vmem>>, vector<16x128xf32>
      tpu.vector_store %arg6[%c0_17, %c0_18], %25 {strides = array<i32>} : memref<16x128xf32, #tpu.memory_space<vmem>>, vector<16x128xf32>,
    } else {
    }
    %c0 = arith.constant 0 : index
    %c0_1 = arith.constant 0 : index
    %c0_2 = arith.constant 0 : index
    %3 = vector.load %arg3[%c0, %c0_1, %c0_2] : memref<1x128x256xf32, #tpu.memory_space<vmem>>, vector<1x128x256xf32>
    %4 = vector.shape_cast %3 : vector<1x128x256xf32> to vector<128x256xf32>
    %c0_3 = arith.constant 0 : index
    %c0_4 = arith.constant 0 : index
    %c0_5 = arith.constant 0 : index
    %5 = vector.load %arg4[%c0_3, %c0_4, %c0_5] : memref<1x128x128xf32, #tpu.memory_space<vmem>>, vector<1x128x128xf32>
    %6 = vector.shape_cast %5 : vector<1x128x128xf32> to vector<128x128xf32>
    %c0_6 = arith.constant 0 : index
    %c0_7 = arith.constant 0 : index
    %7 = vector.load %arg2[%c0_6, %c0_7] : memref<16x128xf32, #tpu.memory_space<vmem>>, vector<16x128xf32>
    %cst = arith.constant dense<0.000000e+00> : vector<16x256xf32>
    %8 = tpu.matmul %7, %4, %cst {dimension_numbers = #tpu.dot_dimension_numbers<[1], [0], [0], [1], [0, 0, 1, 1], [], []>} : vector<16x128xf32>, vector<128x256xf32>, vector<16x256xf32> -> vector<16x256xf32>
    %9 = vector.extract_strided_slice %8 {offsets = [0, 0], sizes = [16, 128], strides = [1, 1]} : vector<16x256xf32> to vector<16x128xf32>
    %10 = vector.extract_strided_slice %8 {offsets = [0, 128], sizes = [16, 128], strides = [1, 1]} : vector<16x256xf32> to vector<16x128xf32>
    %11 = arith.negf %9 : vector<16x128xf32>
    %12 = math.exp %11 : vector<16x128xf32>
    %cst_8 = arith.constant 1.000000e+00 : f32
    %13 = vector.broadcast %cst_8 : f32 to vector<16x128xf32>
    %14 = arith.addf %13, %12 : vector<16x128xf32>
    %15 = arith.divf %13, %14 : vector<16x128xf32>
    %16 = arith.mulf %9, %15 : vector<16x128xf32>
    %17 = arith.mulf %16, %10 : vector<16x128xf32>
    %c0_9 = arith.constant 0 : index
    %c0_10 = arith.constant 0 : index
    %18 = vector.load %arg6[%c0_9, %c0_10] : memref<16x128xf32, #tpu.memory_space<vmem>>, vector<16x128xf32>
    %cst_11 = arith.constant dense<0.000000e+00> : vector<16x128xf32>
    %19 = tpu.matmul %17, %6, %cst_11 {dimension_numbers = #tpu.dot_dimension_numbers<[1], [0], [0], [1], [0, 0, 1, 1], [], []>} : vector<16x128xf32>, vector<128x128xf32>, vector<16x128xf32> -> vector<16x128xf32>
    %20 = arith.addf %18, %19 : vector<16x128xf32>
    %c0_12 = arith.constant 0 : index
    %c0_13 = arith.constant 0 : index
    %21 = vector.load %arg6[%c0_12, %c0_13] : memref<16x128xf32, #tpu.memory_space<vmem>>, vector<16x128xf32>
    tpu.vector_store %arg6[%c0_12, %c0_13], %20 {strides = array<i32>} : memref<16x128xf32, #tpu.memory_space<vmem>>, vector<16x128xf32>,
    %c0_i32_14 = arith.constant 0 : i32
    %22 = arith.cmpi eq, %arg1, %c0_i32_14 : i32
    %23 = arith.extui %22 : i1 to i32
    %c0_i32_15 = arith.constant 0 : i32
    %24 = arith.cmpi ne, %23, %c0_i32_15 : i32
    scf.if %24 {
      %c0_16 = arith.constant 0 : index
      %c0_17 = arith.constant 0 : index
      %25 = vector.load %arg6[%c0_16, %c0_17] : memref<16x128xf32, #tpu.memory_space<vmem>>, vector<16x128xf32>
      %c0_18 = arith.constant 0 : index
      %c0_19 = arith.constant 0 : index
      %26 = vector.load %arg5[%c0_18, %c0_19] : memref<16x128xf32, #tpu.memory_space<vmem>>, vector<16x128xf32>
      tpu.vector_store %arg5[%c0_18, %c0_19], %25 {strides = array<i32>} : memref<16x128xf32, #tpu.memory_space<vmem>>, vector<16x128xf32>,
    } else {
    }
    return
  }
  func.func @transform_0(%arg0: i32, %arg1: i32) -> (i32, i32) {
    %c0_i32 = arith.constant 0 : i32
    %c0_i32_0 = arith.constant 0 : i32
    return %arg0, %c0_i32 : i32, i32
  }
  func.func @transform_1(%arg0: i32, %arg1: i32) -> (i32, i32, i32) {
    %c0_i32 = arith.constant 0 : i32
    %c0_i32_0 = arith.constant 0 : i32
    %c0_i32_1 = arith.constant 0 : i32
    return %arg1, %c0_i32, %c0_i32_0 : i32, i32, i32
  }
  func.func @transform_2(%arg0: i32, %arg1: i32) -> (i32, i32, i32) {
    %c0_i32 = arith.constant 0 : i32
    %c0_i32_0 = arith.constant 0 : i32
    %c0_i32_1 = arith.constant 0 : i32
    return %arg1, %c0_i32, %c0_i32_0 : i32, i32, i32
  }
  func.func @transform_3(%arg0: i32, %arg1: i32) -> (i32, i32) {
    %c0_i32 = arith.constant 0 : i32
    %c0_i32_0 = arith.constant 0 : i32
    return %arg0, %c0_i32 : i32, i32
  }
}

</mosaic_0001>

<llo_original>
// kernel: feed_forward.1
$region0: #{feed_forward.1}
  #allocation0 [shape = 'u32[]', space=smem, size = 0x4, offset = 0x4, fixed_abs, tag = 'smem constant byte address 0x4 - core index']
  #allocation1 [shape = 'u32[144,128]{1,0:T(1,128)}', space=vmem, size = 0x12000, scoped, tag = 'internal scratch']
  #allocation2 [shape = 'f32[16,128]{1,0:T(8,128)}', space=vmem, size = 0x2000, scoped, tag = 'scratch operand']
  %s0 = inlined_call_operand.vmem [shape: f32[16,128], index: 0, kind: input, shape index: {}]
  %s1 = inlined_call_operand.vmem [shape: f32[1,128,256], index: 1, kind: input, shape index: {}]
  %s2 = inlined_call_operand.vmem [shape: f32[1,128,128], index: 2, kind: input, shape index: {}]
  %s3 = inlined_call_operand.vmem [shape: f32[16,128], index: 3, kind: output, shape index: {}]
  %s4 = sld [smem:[#allocation0]]
  $region30: #{feed_forward.1} parent=0
    _
  %s6 = ssub.s32 1, %s4
  %s7 = scalar_select 0, %s6, %s4
  // Predicated region
  $region2: #{feed_forward.1} parent=0 // pred_check
    _
  $region3: #{feed_forward.1} parent=0 // pred_check_branch
    %9 = sbr.rel (0) target = $region5
  $region4: #{feed_forward.1} parent=0 // pred_region
    _
  $region5: #{feed_forward.1} parent=0 // pred_fallthru
    _
  // Predicated region
  $region6: #{feed_forward.1} parent=0 // pred_check
    _
  $region7: #{feed_forward.1} parent=0 // pred_check_branch
    %11 = sbr.rel (0) target = $region9
  $region8: #{feed_forward.1} parent=0 // pred_region
    _
  $region9: #{feed_forward.1} parent=0 // pred_fallthru
    _
  // Predicated region
  $region10: #{feed_forward.1} parent=0 // pred_check
    _
  $region11: #{feed_forward.1} parent=0 // pred_check_branch
    %13 = sbr.rel (0) target = $region13
  $region12: #{feed_forward.1} parent=0 // pred_region
    _
  $region13: #{feed_forward.1} parent=0 // pred_fallthru
    _
  %p14 = scmp.eq.s32.totalorder 0, 0
  // Predicated region
  $region14: #{feed_forward.1} parent=0 // pred_check
    %p15 = pneg %p14
  $region15: #{feed_forward.1} parent=0 // pred_check_branch
    %17 = sbr.rel (%p15) target = $region17
  $region16: #{feed_forward.1} parent=0 // pred_region
    %18 = vst [vmem:[#allocation2] sm:$0xff] 0.0
    %19 = vst [vmem:[#allocation2 + $0x8] sm:$0xff] 0.0
  $region17: #{feed_forward.1} parent=0 // pred_fallthru
    _
  %v20 = vld [vmem:[%s1] sm:$0xff]
  %v21 = vld [vmem:[%s1 + $0x8] sm:$0xff]
  %v22 = vld [vmem:[%s1 + $0x10] sm:$0xff]
  %v23 = vld [vmem:[%s1 + $0x18] sm:$0xff]
  %v24 = vld [vmem:[%s1 + $0x20] sm:$0xff]
  %v25 = vld [vmem:[%s1 + $0x28] sm:$0xff]
  %v26 = vld [vmem:[%s1 + $0x30] sm:$0xff]
  %v27 = vld [vmem:[%s1 + $0x38] sm:$0xff]
  %v28 = vld [vmem:[%s1 + $0x40] sm:$0xff]
  %v29 = vld [vmem:[%s1 + $0x48] sm:$0xff]
  %v30 = vld [vmem:[%s1 + $0x50] sm:$0xff]
  %v31 = vld [vmem:[%s1 + $0x58] sm:$0xff]
  %v32 = vld [vmem:[%s1 + $0x60] sm:$0xff]
  %v33 = vld [vmem:[%s1 + $0x68] sm:$0xff]
  %v34 = vld [vmem:[%s1 + $0x70] sm:$0xff]
  %v35 = vld [vmem:[%s1 + $0x78] sm:$0xff]
  %v36 = vld [vmem:[%s1 + $0x80] sm:$0xff]
  %v37 = vld [vmem:[%s1 + $0x88] sm:$0xff]
  %v38 = vld [vmem:[%s1 + $0x90] sm:$0xff]
  %v39 = vld [vmem:[%s1 + $0x98] sm:$0xff]
  %v40 = vld [vmem:[%s1 + $0xa0] sm:$0xff]
  %v41 = vld [vmem:[%s1 + $0xa8] sm:$0xff]
  %v42 = vld [vmem:[%s1 + $0xb0] sm:$0xff]
  %v43 = vld [vmem:[%s1 + $0xb8] sm:$0xff]
  %v44 = vld [vmem:[%s1 + $0xc0] sm:$0xff]
  %v45 = vld [vmem:[%s1 + $0xc8] sm:$0xff]
  %v46 = vld [vmem:[%s1 + $0xd0] sm:$0xff]
  %v47 = vld [vmem:[%s1 + $0xd8] sm:$0xff]
  %v48 = vld [vmem:[%s1 + $0xe0] sm:$0xff]
  %v49 = vld [vmem:[%s1 + $0xe8] sm:$0xff]
  %v50 = vld [vmem:[%s1 + $0xf0] sm:$0xff]
  %v51 = vld [vmem:[%s1 + $0xf8] sm:$0xff]
  %v52 = vld [vmem:[%s2] sm:$0xff]
  %v53 = vld [vmem:[%s2 + $0x8] sm:$0xff]
  %v54 = vld [vmem:[%s2 + $0x10] sm:$0xff]
  %v55 = vld [vmem:[%s2 + $0x18] sm:$0xff]
  %v56 = vld [vmem:[%s2 + $0x20] sm:$0xff]
  %v57 = vld [vmem:[%s2 + $0x28] sm:$0xff]
  %v58 = vld [vmem:[%s2 + $0x30] sm:$0xff]
  %v59 = vld [vmem:[%s2 + $0x38] sm:$0xff]
  %v60 = vld [vmem:[%s2 + $0x40] sm:$0xff]
  %v61 = vld [vmem:[%s2 + $0x48] sm:$0xff]
  %v62 = vld [vmem:[%s2 + $0x50] sm:$0xff]
  %v63 = vld [vmem:[%s2 + $0x58] sm:$0xff]
  %v64 = vld [vmem:[%s2 + $0x60] sm:$0xff]
  %v65 = vld [vmem:[%s2 + $0x68] sm:$0xff]
  %v66 = vld [vmem:[%s2 + $0x70] sm:$0xff]
  %v67 = vld [vmem:[%s2 + $0x78] sm:$0xff]
  %v68 = vld [vmem:[%s0] sm:$0xff]
  %v69 = vld [vmem:[%s0 + $0x8] sm:$0xff]
  %70 = vmatprep.subr.mxu0 %v21
  %71 = vmatpush1.msra.mxu0 %v20
  %72 = vmatprep.subr.mxu0 %v23
  %73 = vmatpush1.msra.mxu0 %v22
  %74 = vmatprep.subr.mxu0 %v25
  %75 = vmatpush1.msra.mxu0 %v24
  %76 = vmatprep.subr.mxu0 %v27
  %77 = vmatpush1.msra.mxu0 %v26
  %78 = vmatprep.subr.mxu0 %v29
  %79 = vmatpush1.msra.mxu0 %v28
  %80 = vmatprep.subr.mxu0 %v31
  %81 = vmatpush1.msra.mxu0 %v30
  %82 = vmatprep.subr.mxu0 %v33
  %83 = vmatpush1.msra.mxu0 %v32
  %84 = vmatprep.subr.mxu0 %v35
  %85 = vmatpush1.msra.mxu0 %v34
  %86 = vmatprep.subr.mxu0 %v37
  %87 = vmatpush1.msra.mxu0 %v36
  %88 = vmatprep.subr.mxu0 %v39
  %89 = vmatpush1.msra.mxu0 %v38
  %90 = vmatprep.subr.mxu0 %v41
  %91 = vmatpush1.msra.mxu0 %v40
  %92 = vmatprep.subr.mxu0 %v43
  %93 = vmatpush1.msra.mxu0 %v42
  %94 = vmatprep.subr.mxu0 %v45
  %95 = vmatpush1.msra.mxu0 %v44
  %96 = vmatprep.subr.mxu0 %v47
  %97 = vmatpush1.msra.mxu0 %v46
  %98 = vmatprep.subr.mxu0 %v49
  %99 = vmatpush1.msra.mxu0 %v48
  %100 = vmatprep.subr.mxu0 %v51
  %101 = vmatpush1.msra.mxu0 %v50
  %102 = vmatprep.subr.mxu0 0.0
  %103 = vmatpush1.msra.mxu0 0.0
  %104 = vmatprep.subr.mxu0 0.0
  %105 = vmatpush1.msra.mxu0 0.0
  %106 = vmatprep.subr.mxu0 0.0
  %107 = vmatpush1.msra.mxu0 0.0
  %108 = vmatprep.subr.mxu0 0.0
  %109 = vmatpush1.msra.mxu0 0.0
  %110 = vmatprep.subr.mxu0 0.0
  %111 = vmatpush1.msra.mxu0 0.0
  %112 = vmatprep.subr.mxu0 0.0
  %113 = vmatpush1.msra.mxu0 0.0
  %114 = vmatprep.subr.mxu0 0.0
  %115 = vmatpush1.msra.mxu0 0.0
  %116 = vmatprep.subr.mxu0 0.0
  %117 = vmatpush1.msra.mxu0 0.0
  %118 = vmatprep.subr.mxu0 0.0
  %119 = vmatpush1.msra.mxu0 0.0
  %120 = vmatprep.subr.mxu0 0.0
  %121 = vmatpush1.msra.mxu0 0.0
  %122 = vmatprep.subr.mxu0 0.0
  %123 = vmatpush1.msra.mxu0 0.0
  %124 = vmatprep.subr.mxu0 0.0
  %125 = vmatpush1.msra.mxu0 0.0
  %126 = vmatprep.subr.mxu0 0.0
  %127 = vmatpush1.msra.mxu0 0.0
  %128 = vmatprep.subr.mxu0 0.0
  %129 = vmatpush1.msra.mxu0 0.0
  %130 = vmatprep.subr.mxu0 0.0
  %131 = vmatpush1.msra.mxu0 0.0
  %132 = vmatprep.subr.mxu0 0.0
  %133 = vmatpush1.msra.mxu0 0.0
  %134 = vmatprep.mubr.f32.mxu0 0.0
  %135 = vmatmul.mubr.f32.gmra.mrb[0].mxu0 %v68
  %v136 = vpop.f32.mrb[0].mxu0
  %v137 = vadd.f32 0.0, %v136
  %v138 = vpop.f32.mrb[0].mxu0
  %v139 = vadd.f32 0.0, %v138
  %140 = vmatprep.mubr.f32.mxu0 0.0
  %141 = vmatmul.mubr.f32.gmra.mrb[0].mxu0 %v69
  %v142 = vpop.f32.mrb[0].mxu0
  %v143 = vadd.f32 0.0, %v142
  %v144 = vpop.f32.mrb[0].mxu0
  %v145 = vadd.f32 0.0, %v144
  %146 = vdwg.mxu0
  %v147 = vxor.u32 %v137, 2147483648
  %v148 = vxor.u32 %v143, 2147483648
  %v149 = vmul.f32 %v147, 1.442695
  %v150 = vpow.pop %v149
  %v151 = vmul.f32 %v148, 1.442695
  %v152 = vpow.pop %v151
  %v153 = vadd.f32 %v150, 1.0
  %v154 = vadd.f32 %v152, 1.0
  %v155 = vrcp.pop %v153
  %v156 = vmul.f32 1.0, %v155
  %v157 = vrcp.pop %v154
  %v158 = vmul.f32 1.0, %v157
  %v159 = vmul.f32 %v137, %v156
  %v160 = vmul.f32 %v143, %v158
  %v161 = vmul.f32 %v159, %v139
  %v162 = vmul.f32 %v160, %v145
  %v163 = vld [vmem:[#allocation2] sm:$0xff]
  %v164 = vld [vmem:[#allocation2 + $0x8] sm:$0xff]
  %165 = vmatprep.subr.mxu0 0.0
  %166 = vmatpush1.msra.mxu0 %v52
  %167 = vmatprep.subr.mxu0 0.0
  %168 = vmatpush1.msra.mxu0 %v53
  %169 = vmatprep.subr.mxu0 0.0
  %170 = vmatpush1.msra.mxu0 %v54
  %171 = vmatprep.subr.mxu0 0.0
  %172 = vmatpush1.msra.mxu0 %v55
  %173 = vmatprep.subr.mxu0 0.0
  %174 = vmatpush1.msra.mxu0 %v56
  %175 = vmatprep.subr.mxu0 0.0
  %176 = vmatpush1.msra.mxu0 %v57
  %177 = vmatprep.subr.mxu0 0.0
  %178 = vmatpush1.msra.mxu0 %v58
  %179 = vmatprep.subr.mxu0 0.0
  %180 = vmatpush1.msra.mxu0 %v59
  %181 = vmatprep.subr.mxu0 0.0
  %182 = vmatpush1.msra.mxu0 %v60
  %183 = vmatprep.subr.mxu0 0.0
  %184 = vmatpush1.msra.mxu0 %v61
  %185 = vmatprep.subr.mxu0 0.0
  %186 = vmatpush1.msra.mxu0 %v62
  %187 = vmatprep.subr.mxu0 0.0
  %188 = vmatpush1.msra.mxu0 %v63
  %189 = vmatprep.subr.mxu0 0.0
  %190 = vmatpush1.msra.mxu0 %v64
  %191 = vmatprep.subr.mxu0 0.0
  %192 = vmatpush1.msra.mxu0 %v65
  %193 = vmatprep.subr.mxu0 0.0
  %194 = vmatpush1.msra.mxu0 %v66
  %195 = vmatprep.subr.mxu0 0.0
  %196 = vmatpush1.msra.mxu0 %v67
  %197 = vmatprep.subr.mxu0 0.0
  %198 = vmatpush1.msra.mxu0 0.0
  %199 = vmatprep.subr.mxu0 0.0
  %200 = vmatpush1.msra.mxu0 0.0
  %201 = vmatprep.subr.mxu0 0.0
  %202 = vmatpush1.msra.mxu0 0.0
  %203 = vmatprep.subr.mxu0 0.0
  %204 = vmatpush1.msra.mxu0 0.0
  %205 = vmatprep.subr.mxu0 0.0
  %206 = vmatpush1.msra.mxu0 0.0
  %207 = vmatprep.subr.mxu0 0.0
  %208 = vmatpush1.msra.mxu0 0.0
  %209 = vmatprep.subr.mxu0 0.0
  %210 = vmatpush1.msra.mxu0 0.0
  %211 = vmatprep.subr.mxu0 0.0
  %212 = vmatpush1.msra.mxu0 0.0
  %213 = vmatprep.subr.mxu0 0.0
  %214 = vmatpush1.msra.mxu0 0.0
  %215 = vmatprep.subr.mxu0 0.0
  %216 = vmatpush1.msra.mxu0 0.0
  %217 = vmatprep.subr.mxu0 0.0
  %218 = vmatpush1.msra.mxu0 0.0
  %219 = vmatprep.subr.mxu0 0.0
  %220 = vmatpush1.msra.mxu0 0.0
  %221 = vmatprep.subr.mxu0 0.0
  %222 = vmatpush1.msra.mxu0 0.0
  %223 = vmatprep.subr.mxu0 0.0
  %224 = vmatpush1.msra.mxu0 0.0
  %225 = vmatprep.subr.mxu0 0.0
  %226 = vmatpush1.msra.mxu0 0.0
  %227 = vmatprep.subr.mxu0 0.0
  %228 = vmatpush1.msra.mxu0 0.0
  %229 = vmatprep.mubr.f32.mxu0 0.0
  %230 = vmatmul.mubr.f32.gmra.mrb[0].mxu0 %v161
  %v231 = vpop.f32.mrb[0].mxu0
  %v232 = vadd.f32 0.0, %v231
  %v233 = vpop.f32.mrb[0].mxu0
  %234 = vmatprep.mubr.f32.mxu0 0.0
  %235 = vmatmul.mubr.f32.gmra.mrb[0].mxu0 %v162
  %v236 = vpop.f32.mrb[0].mxu0
  %v237 = vadd.f32 0.0, %v236
  %v238 = vpop.f32.mrb[0].mxu0
  %239 = vdwg.mxu0
  %v240 = vadd.f32 %v163, %v232
  %v241 = vadd.f32 %v164, %v237
  %242 = vst [vmem:[#allocation2] sm:$0xff] %v240
  %243 = vst [vmem:[#allocation2 + $0x8] sm:$0xff] %v241
  // Predicated region
  $region18: #{feed_forward.1} parent=0 // pred_check
    %p244 = pneg %p14
  $region19: #{feed_forward.1} parent=0 // pred_check_branch
    %246 = sbr.rel (%p244) target = $region21
  $region20: #{feed_forward.1} parent=0 // pred_region
    %v247 = vld [vmem:[#allocation2] sm:$0xff]
    %v248 = vld [vmem:[#allocation2 + $0x8] sm:$0xff]
    %249 = vst [vmem:[%s3] sm:$0xff] %v247
    %250 = vst [vmem:[%s3 + $0x8] sm:$0xff] %v248
  $region21: #{feed_forward.1} parent=0 // pred_fallthru
    _
  // Predicated region
  $region22: #{feed_forward.1} parent=0 // pred_check
    _
  $region23: #{feed_forward.1} parent=0 // pred_check_branch
    %252 = sbr.rel (0) target = $region25
  $region24: #{feed_forward.1} parent=0 // pred_region
    _
  $region25: #{feed_forward.1} parent=0 // pred_fallthru
    _
  // Predicated region
  $region26: #{feed_forward.1} parent=0 // pred_check
    _
  $region27: #{feed_forward.1} parent=0 // pred_check_branch
    %254 = sbr.rel (0) target = $region29
  $region28: #{feed_forward.1} parent=0 // pred_region
    _
  $region29: #{feed_forward.1} parent=0 // pred_fallthru
    _

</llo_original>
